<compile_context>
chip_gen: v7x
topology: tpu7x:2x2x1
jax: 0.10.0
libtpu: 0.0.40
codegen_flags: <defaults>
</compile_context>

<pallas_src>
import functools

import jax
import jax.numpy as jnp
from jax.experimental import pallas as pl
from jax.experimental.pallas import tpu as pltpu


def _round_up(x, m):
    return (x + m - 1) // m * m


def _vmem_capacity_bytes():
    try:
        info = pltpu.get_tpu_info()
        cap = getattr(info, "vmem_capacity_bytes", None)
        if cap:
            return int(cap)
    except Exception:
        pass
    return 64 * 1024 * 1024  # conservative default (v7x-sized)


def csa_kernel(feat_ref, pos_ref, wkq_ref, wv_ref, out_ref, *,
               channels, qsum_row, compute_dtype):
    feat = feat_ref[...]                        # (C, TN) in input dtype (f32)
    pos = pos_ref[...]                          # (C, TN) in compute_dtype

    # One MXU pass over the stacked weight gives k (rows [0, C)) and
    # sum_i q[i, n] (row `qsum_row`, which holds sum_i Wq[i, :]).
    kq = jnp.dot(wkq_ref[...], pos, preferred_element_type=jnp.float32)      # (R, TN)
    v = jnp.dot(wv_ref[...], feat.astype(compute_dtype),
                preferred_element_type=jnp.float32)                          # (C, TN)

    k = kq[:channels, :]                        # (C, TN)
    qsum = kq[qsum_row:qsum_row + 1, :]         # (1, TN)

    # energy[j, n] = sum_i q[i, n] * k[j, n] = k[j, n] * qsum[n]
    energy = k * qsum

    # Per-point normalization over channels j. The denominator is not guaranteed
    # positive or away from zero (mirrors PyTorch), so use the exact reciprocal.
    denom = 1e-9 + jnp.sum(energy, axis=0, keepdims=True)                    # (1, TN)
    energy = energy * pl.reciprocal(denom, approx=False)

    # Softmax over channels (dim=1 of the (B, C, N) layout).
    m = jnp.max(energy, axis=0, keepdims=True)
    e = jnp.exp(energy - m)
    inv = pl.reciprocal(jnp.sum(e, axis=0, keepdims=True), approx=True)

    # x_r = attention * x_v ; x = x_r + feature   (residual in input precision)
    out_ref[...] = (e * inv * v + feat).astype(out_ref.dtype)


def _pick_tile_n(channels, n_pad, feat_itemsize, pos_itemsize, vmem_capacity):
    """Largest lane-dense N tile dividing n_pad whose VMEM footprint fits the budget."""
    r = _round_up(channels, 8) + 8
    budget = int(0.55 * vmem_capacity)

    def tile_bytes(tn):
        # feat + out (input dtype) and pos (compute dtype), double-buffered by Pallas.
        io = 2 * channels * tn * (2 * feat_itemsize + pos_itemsize)
        # Live f32 intermediates (kq, v, energy, e, casts, ...) — generous estimate.
        tmp = (8 * channels + r) * tn * 4
        return io + tmp

    for tn in (8192, 4096, 2048, 1024, 512, 256, 128):
        if n_pad % tn == 0 and tile_bytes(tn) <= budget:
            return tn, tile_bytes(tn)
    return 128, tile_bytes(128)


def _stack_wkq(wq, wk, c_pad, compute_dtype):
    """Stack [Wk ; zero pad ; column-sum(Wq) ; zero pad] -> (c_pad + 8, C)."""
    C = wk.shape[0]
    wq_colsum = jnp.sum(wq.astype(jnp.float32), axis=0, keepdims=True)       # (1, C)
    parts = [wk.astype(jnp.float32)]
    if c_pad > C:
        parts.append(jnp.zeros((c_pad - C, C), jnp.float32))
    parts.append(wq_colsum)                                                  # row c_pad
    parts.append(jnp.zeros((7, C), jnp.float32))
    return jnp.concatenate(parts, axis=0).astype(compute_dtype)


def csa_layer(feature, position, wq, wk, wv, *, compute_dtype=jnp.bfloat16):
    B, C, N = feature.shape

    # Pad N to a multiple of 128 so every tile is lane-dense (unmasked stores) and the
    # VMEM footprint stays bounded. Padded points are independent per-point work that
    # produces finite values (zeros) and is sliced off afterwards.
    n_pad = _round_up(N, 128)
    if n_pad != N:
        padw = [(0, 0), (0, 0), (0, n_pad - N)]
        feature_p = jnp.pad(feature, padw)
        position_p = jnp.pad(position, padw)
    else:
        feature_p, position_p = feature, position

    # position only feeds the MXU -> ship it in compute_dtype (halves its DMA bytes on
    # the bf16 path). feature stays in input dtype for an exact residual add.
    pos_c = position_p.astype(compute_dtype)

    c_pad = _round_up(C, 8)
    wkq = _stack_wkq(wq, wk, c_pad, compute_dtype)                           # (R, C)
    wv_c = wv.astype(compute_dtype)
    R = c_pad + 8

    cap = _vmem_capacity_bytes()
    feat_it = jnp.dtype(feature.dtype).itemsize
    pos_it = jnp.dtype(compute_dtype).itemsize
    tn, tile_need = _pick_tile_n(C, n_pad, feat_it, pos_it, cap)

    weight_bytes = (R * C + C * C) * jnp.dtype(compute_dtype).itemsize
    vmem_limit = int(min(int(0.75 * cap),
                         max(32 * 1024 * 1024,
                             tile_need + 2 * weight_bytes + 2 * 1024 * 1024)))

    grid = (n_pad // tn, B)  # big parallel axis first (v7x 2-TC split)
    kernel = functools.partial(csa_kernel, channels=C, qsum_row=c_pad,
                               compute_dtype=compute_dtype)

    out = pl.pallas_call(
        kernel,
        out_shape=jax.ShapeDtypeStruct((B, C, n_pad), feature.dtype),
        grid_spec=pltpu.PrefetchScalarGridSpec(
            num_scalar_prefetch=0,
            grid=grid,
            in_specs=[
                pl.BlockSpec((pl.Squeezed(), C, tn), lambda n, b: (b, 0, n)),  # feature
                pl.BlockSpec((pl.Squeezed(), C, tn), lambda n, b: (b, 0, n)),  # position
                pl.BlockSpec((R, C), lambda n, b: (0, 0)),                     # [Wk; colsum(Wq)]
                pl.BlockSpec((C, C), lambda n, b: (0, 0)),                     # Wv
            ],
            out_specs=pl.BlockSpec((pl.Squeezed(), C, tn), lambda n, b: (b, 0, n)),
        ),
        compiler_params=pltpu.CompilerParams(
            dimension_semantics=("parallel", "parallel"),
            vmem_limit_bytes=vmem_limit,
        ),
    )(feature_p, pos_c, wkq, wv_c)

    if n_pad != N:
        out = out[:, :, :N]
    return out


def csa_reference(feature, position, wq, wk, wv, compute_dtype=jnp.float32):
    """Pure-JAX reference mirroring the PyTorch code literally (matmul inputs optionally
    quantized to compute_dtype, f32 accumulation, full-precision matmul passes)."""
    f32 = jnp.float32
    hi = jax.lax.Precision.HIGHEST
    pos_c = position.astype(compute_dtype)
    feat_c = feature.astype(compute_dtype)
    q = jnp.einsum("oc,bcn->bon", wq.astype(compute_dtype), pos_c,
                   preferred_element_type=f32, precision=hi)
    k = jnp.einsum("oc,bcn->bon", wk.astype(compute_dtype), pos_c,
                   preferred_element_type=f32, precision=hi)
    v = jnp.einsum("oc,bcn->bon", wv.astype(compute_dtype), feat_c,
                   preferred_element_type=f32, precision=hi)
    x_q = jnp.transpose(q, (0, 2, 1))[:, :, :, None]     # (B, N, C, 1)
    x_k = jnp.transpose(k, (0, 2, 1))[:, :, None, :]     # (B, N, 1, C)
    energy = jnp.matmul(x_q, x_k, precision=hi)          # (B, N, C, C)
    energy = jnp.sum(energy, axis=-2)                    # (B, N, C)
    energy = energy / (1e-9 + jnp.sum(energy, axis=-1, keepdims=True))
    attention = jax.nn.softmax(jnp.transpose(energy, (0, 2, 1)), axis=1)  # (B, C, N)
    return (attention * v + feature.astype(f32)).astype(feature.dtype)


if __name__ == "__main__":
    # --- Case 1: small, unaligned N (exercises the pad-to-128 path), f32 compute ---
    B, C, N = 2, 4, 16
    key = jax.random.PRNGKey(0)
    k_feat, k_pos, k_wq, k_wk, k_wv = jax.random.split(key, 5)
    scale = 1.0 / jnp.sqrt(jnp.float32(C))
    feature = jax.random.normal(k_feat, (B, C, N), dtype=jnp.float32)
    position = jax.random.normal(k_pos, (B, C, N), dtype=jnp.float32)
    # Conv1d(channels, channels, 1, bias=False) weights: (C_out, C_in, 1) -> (C, C).
    wq = jax.random.normal(k_wq, (C, C), dtype=jnp.float32) * scale
    wk = jax.random.normal(k_wk, (C, C), dtype=jnp.float32) * scale
    wv = jax.random.normal(k_wv, (C, C), dtype=jnp.float32) * scale

    out = csa_layer(feature, position, wq, wk, wv, compute_dtype=jnp.float32)
    jax.block_until_ready(out)
    ref = csa_reference(feature, position, wq, wk, wv, compute_dtype=jnp.float32)
    assert out.shape == (B, C, N)
    assert jnp.allclose(out, ref, atol=5e-3, rtol=5e-3), "case1 f32 mismatch vs reference"

    # --- Case 2: tiled path (N = 3 tiles of 128 per batch, C >= 8), f32 + bf16 ---
    # position / Wq / Wk kept positive so the per-point normalizer (1e-9 + sum_j energy)
    # stays well away from zero; this keeps the kernel-vs-reference comparison
    # numerically meaningful under bf16 while still validating tiling/indexing.
    B2, C2, N2 = 2, 8, 384
    key2 = jax.random.PRNGKey(0)
    k_f2, k_p2, k_q2, k_k2, k_v2 = jax.random.split(key2, 5)
    feature2 = jax.random.normal(k_f2, (B2, C2, N2), dtype=jnp.float32)
    position2 = jax.random.uniform(k_p2, (B2, C2, N2), dtype=jnp.float32,
                                   minval=0.5, maxval=1.5)
    wq2 = jax.random.uniform(k_q2, (C2, C2), dtype=jnp.float32,
                             minval=0.1, maxval=1.0) / C2
    wk2 = jax.random.uniform(k_k2, (C2, C2), dtype=jnp.float32,
                             minval=0.1, maxval=1.0) / C2
    wv2 = jax.random.normal(k_v2, (C2, C2), dtype=jnp.float32) / jnp.sqrt(jnp.float32(C2))

    out2_f32 = csa_layer(feature2, position2, wq2, wk2, wv2, compute_dtype=jnp.float32)
    jax.block_until_ready(out2_f32)
    ref2_f32 = csa_reference(feature2, position2, wq2, wk2, wv2, compute_dtype=jnp.float32)
    assert out2_f32.shape == (B2, C2, N2)
    assert jnp.allclose(out2_f32, ref2_f32, atol=5e-3, rtol=5e-3), "case2 f32 mismatch"

    out2_bf16 = csa_layer(feature2, position2, wq2, wk2, wv2, compute_dtype=jnp.bfloat16)
    jax.block_until_ready(out2_bf16)
    ref2_bf16 = csa_reference(feature2, position2, wq2, wk2, wv2, compute_dtype=jnp.bfloat16)
    assert jnp.allclose(out2_bf16, ref2_bf16, atol=2e-2, rtol=2e-2), "case2 bf16 mismatch"

    print("KERNEL_OK")
</pallas_src>

<mosaic_0001>
module attributes {stable_mosaic.version = 11 : i64} {
  func.func @csa_kernel(%arg0: i32, %arg1: i32, %arg2: memref<1x4x128xf32, #tpu.memory_space<vmem>>, %arg3: memref<1x4x128xf32, #tpu.memory_space<vmem>>, %arg4: memref<16x4xf32, #tpu.memory_space<vmem>>, %arg5: memref<4x4xf32, #tpu.memory_space<vmem>>, %arg6: memref<1x4x128xf32, #tpu.memory_space<vmem>>) attributes {dimension_semantics = [#tpu.dimension_semantics<parallel>, #tpu.dimension_semantics<parallel>], iteration_bounds = array<i64: 1, 2>, scalar_prefetch = 0 : i64, scratch_operands = 0 : i64, tpu.core_type = #tpu.core_type<tc>, window_params = [{transform_indices = @transform_0, window_bounds = array<i64: 1, 4, 128>}, {transform_indices = @transform_1, window_bounds = array<i64: 1, 4, 128>}, {pipeline_mode = #tpu.pipeline_mode<synchronous>, transform_indices = @transform_2, window_bounds = array<i64: 16, 4>}, {pipeline_mode = #tpu.pipeline_mode<synchronous>, transform_indices = @transform_3, window_bounds = array<i64: 4, 4>}, {transform_indices = @transform_4, window_bounds = array<i64: 1, 4, 128>}]} {
    %c0 = arith.constant 0 : index
    %c0_0 = arith.constant 0 : index
    %c0_1 = arith.constant 0 : index
    %0 = vector.load %arg2[%c0, %c0_0, %c0_1] : memref<1x4x128xf32, #tpu.memory_space<vmem>>, vector<1x4x128xf32>
    %1 = vector.shape_cast %0 : vector<1x4x128xf32> to vector<4x128xf32>
    %c0_2 = arith.constant 0 : index
    %c0_3 = arith.constant 0 : index
    %c0_4 = arith.constant 0 : index
    %2 = vector.load %arg3[%c0_2, %c0_3, %c0_4] : memref<1x4x128xf32, #tpu.memory_space<vmem>>, vector<1x4x128xf32>
    %3 = vector.shape_cast %2 : vector<1x4x128xf32> to vector<4x128xf32>
    %c0_5 = arith.constant 0 : index
    %c0_6 = arith.constant 0 : index
    %4 = vector.load %arg4[%c0_5, %c0_6] : memref<16x4xf32, #tpu.memory_space<vmem>>, vector<16x4xf32>
    %cst = arith.constant dense<0.000000e+00> : vector<16x128xf32>
    %5 = tpu.matmul %4, %3, %cst {dimension_numbers = #tpu.dot_dimension_numbers<[1], [0], [0], [1], [0, 0, 1, 1], [], []>} : vector<16x4xf32>, vector<4x128xf32>, vector<16x128xf32> -> vector<16x128xf32>
    %c0_7 = arith.constant 0 : index
    %c0_8 = arith.constant 0 : index
    %6 = vector.load %arg5[%c0_7, %c0_8] : memref<4x4xf32, #tpu.memory_space<vmem>>, vector<4x4xf32>
    %cst_9 = arith.constant dense<0.000000e+00> : vector<4x128xf32>
    %7 = tpu.matmul %6, %1, %cst_9 {dimension_numbers = #tpu.dot_dimension_numbers<[1], [0], [0], [1], [0, 0, 1, 1], [], []>} : vector<4x4xf32>, vector<4x128xf32>, vector<4x128xf32> -> vector<4x128xf32>
    %8 = vector.extract_strided_slice %5 {offsets = [0, 0], sizes = [4, 128], strides = [1, 1]} : vector<16x128xf32> to vector<4x128xf32>
    %9 = vector.extract_strided_slice %5 {offsets = [8, 0], sizes = [1, 128], strides = [1, 1]} : vector<16x128xf32> to vector<1x128xf32>
    %10 = vector.broadcast %9 : vector<1x128xf32> to vector<4x128xf32>
    %11 = arith.mulf %8, %10 : vector<4x128xf32>
    %cst_10 = arith.constant dense<0.000000e+00> : vector<128xf32>
    %12 = vector.multi_reduction <add>, %11, %cst_10 [0] : vector<4x128xf32> to vector<128xf32>
    %13 = vector.shape_cast %12 : vector<128xf32> to vector<1x128xf32>
    %cst_11 = arith.constant 9.99999971E-10 : f32
    %14 = vector.broadcast %cst_11 : f32 to vector<1x128xf32>
    %15 = arith.addf %14, %13 : vector<1x128xf32>
    %16 = tpu.reciprocal %15 : vector<1x128xf32> -> vector<1x128xf32>
    %17 = vector.broadcast %16 : vector<1x128xf32> to vector<4x128xf32>
    %18 = arith.mulf %11, %17 : vector<4x128xf32>
    %cst_12 = arith.constant dense<0xFF800000> : vector<128xf32>
    %19 = vector.multi_reduction <maximumf>, %18, %cst_12 [0] : vector<4x128xf32> to vector<128xf32>
    %20 = vector.shape_cast %19 : vector<128xf32> to vector<1x128xf32>
    %21 = vector.broadcast %20 : vector<1x128xf32> to vector<4x128xf32>
    %22 = arith.subf %18, %21 : vector<4x128xf32>
    %23 = math.exp %22 : vector<4x128xf32>
    %cst_13 = arith.constant dense<0.000000e+00> : vector<128xf32>
    %24 = vector.multi_reduction <add>, %23, %cst_13 [0] : vector<4x128xf32> to vector<128xf32>
    %25 = vector.shape_cast %24 : vector<128xf32> to vector<1x128xf32>
    %26 = tpu.reciprocal %25 {approx = true} : vector<1x128xf32> -> vector<1x128xf32>
    %27 = vector.broadcast %26 : vector<1x128xf32> to vector<4x128xf32>
    %28 = arith.mulf %23, %27 : vector<4x128xf32>
    %29 = arith.mulf %28, %7 : vector<4x128xf32>
    %30 = arith.addf %29, %1 : vector<4x128xf32>
    %c0_14 = arith.constant 0 : index
    %c0_15 = arith.constant 0 : index
    %c0_16 = arith.constant 0 : index
    %31 = vector.load %arg6[%c0_14, %c0_15, %c0_16] : memref<1x4x128xf32, #tpu.memory_space<vmem>>, vector<1x4x128xf32>
    %32 = vector.shape_cast %31 : vector<1x4x128xf32> to vector<4x128xf32>
    %33 = vector.shape_cast %30 : vector<4x128xf32> to vector<1x4x128xf32>
    tpu.vector_store %arg6[%c0_14, %c0_15, %c0_16], %33 {strides = array<i32>} : memref<1x4x128xf32, #tpu.memory_space<vmem>>, vector<1x4x128xf32>,
    return
  }
  func.func @transform_0(%arg0: i32, %arg1: i32) -> (i32, i32, i32) {
    %c0_i32 = arith.constant 0 : i32
    %c0_i32_0 = arith.constant 0 : i32
    return %arg1, %c0_i32, %arg0 : i32, i32, i32
  }
  func.func @transform_1(%arg0: i32, %arg1: i32) -> (i32, i32, i32) {
    %c0_i32 = arith.constant 0 : i32
    %c0_i32_0 = arith.constant 0 : i32
    return %arg1, %c0_i32, %arg0 : i32, i32, i32
  }
  func.func @transform_2(%arg0: i32, %arg1: i32) -> (i32, i32) {
    %c0_i32 = arith.constant 0 : i32
    %c0_i32_0 = arith.constant 0 : i32
    %c0_i32_1 = arith.constant 0 : i32
    return %c0_i32, %c0_i32_0 : i32, i32
  }
  func.func @transform_3(%arg0: i32, %arg1: i32) -> (i32, i32) {
    %c0_i32 = arith.constant 0 : i32
    %c0_i32_0 = arith.constant 0 : i32
    %c0_i32_1 = arith.constant 0 : i32
    return %c0_i32, %c0_i32_0 : i32, i32
  }
  func.func @transform_4(%arg0: i32, %arg1: i32) -> (i32, i32, i32) {
    %c0_i32 = arith.constant 0 : i32
    %c0_i32_0 = arith.constant 0 : i32
    return %arg1, %c0_i32, %arg0 : i32, i32, i32
  }
}

</mosaic_0001>

<llo_original>
// kernel: tpu_custom_call.1
$region0: #{tpu_custom_call.1}
  #allocation0 [shape = 'u32[]', space=smem, size = 0x4, offset = 0x4, fixed_abs, tag = 'smem constant byte address 0x4 - core index']
  #allocation1 [shape = 'u32[144,128]{1,0:T(1,128)}', space=vmem, size = 0x12000, scoped, tag = 'internal scratch']
  %s0 = inlined_call_operand.vmem [shape: f32[2,4,128], index: 0, kind: input, shape index: {}]
  %s1 = inlined_call_operand.vmem [shape: f32[2,4,128], index: 1, kind: input, shape index: {}]
  %s2 = inlined_call_operand.vmem [shape: f32[16,4], index: 2, kind: input, shape index: {}]
  %s3 = inlined_call_operand.vmem [shape: f32[4,4], index: 3, kind: input, shape index: {}]
  %s4 = inlined_call_operand.hbm [shape: f32[2,4,128], index: 4, kind: output, shape index: {}]
  %s5 = sld [smem:[#allocation0]]
  $region49: #{tpu_custom_call.1} parent=0
    _
  %s7 = ssub.s32 1, %s5
  %s8 = scalar_select 0, %s7, %s5
  $region1: #{tpu_custom_call.1} parent=0
    #allocation2 [shape = 'u8[4096]{0}', space=vmem, size = 0x1000, scoped, tag = 'output window, operand 0']
    #allocation3 [shape = 's32[2]{0}', space=sflag, size = 0x8, scoped, tag = 'scoped memory for tpu_custom_call.1']
    %9 = vsyncpa [#allocation3], 0
    %s10 = scalar_lea.sflag [#allocation3], 1
    %11 = vsyncpa %s10, 0
    loop: start=0, step=1, limit=4
    $region2: #{tpu_custom_call.1} parent=1 // loop_pre_header
      _
    $region3: #{tpu_custom_call.1} parent=1 // loop_header
      %s13 = sphi 0, %s17
      %p14 = scmp.ge.s32.totalorder %s13, 4
      %s20 = sphi 0, %s32
      %s21 = sphi 0, %s28
      %s22 = sphi 0, %s20
      %s23 = sphi 0, %s21
      %s24 = sphi 0, %s22
      %s25 = sphi 0, %s23
      %s37 = sphi 0, %s39
      %s40 = sphi 0, %s37
      %s41 = sphi 0, %s40
      %s57 = sphi 0, %s41
      %s65 = sphi 0, %s67
      %s68 = sphi 0, %s65
      %s69 = sphi 0, %s68
      %s85 = sphi 0, %s69
      %s89 = sphi 0, %s89
      %s91 = sphi 0, %s89
      %s92 = sphi 0, %s91
      %s106 = sphi 0, %s92
      %s110 = sphi 0, %s110
      %s112 = sphi 0, %s110
      %s113 = sphi 0, %s112
      %s127 = sphi 0, %s113
      %s135 = sphi 0, %s137
      %s138 = sphi 0, %s135
      %s139 = sphi 0, %s138
      %s155 = sphi 0, %s139
    $region4: #{tpu_custom_call.1} parent=1 // loop_header_branch
      %16 = sbr.rel (%p14) target = $region8
    $region5: #{tpu_custom_call.1} parent=1 // loop_body
      %s18 = ssub.s32 %s13, 1
      %s19 = ssub.s32 %s13, 2
      %s26 = sadd.s32 1, %s21
      %p27 = scmp.ge.s32.totalorder %s26, 2
      %s28 = scalar_select %p27, 0, %s26
      %s29 = sadd.s32 1, %s20
      %s30 = scalar_select %p27, %s29, %s20
      %p31 = scmp.ge.s32.totalorder %s30, 1
      %s32 = scalar_select %p31, 0, %s30
      %s33 = ssub.s32 %s21, %s28
      %s34 = ssub.s32 %s20, %s32
      %s35 = sor.u32 %s33, %s34
      %p36 = scmp.eq.s32.totalorder %s35, 0
      %s38 = sadd.s32 %s37, 1
      %s39 = scalar_select %p36, %s37, %s38
      %p42 = pneg %p36
      %p43 = scmp.eq.s32.totalorder %s13, 1
      %p44 = por %p42, %p43
      %p45 = scmp.ne.s32.totalorder %s37, %s40
      %p46 = scmp.eq.s32.totalorder %s13, 0
      %p47 = por %p45, %p46
      %p48 = scmp.ne.s32.totalorder %s37, %s40
      %p49 = scmp.eq.s32.totalorder %s18, 1
      %p50 = por %p48, %p49
      %p51 = scmp.ne.s32.totalorder %s40, %s41
      %p52 = scmp.eq.s32.totalorder %s18, 0
      %p53 = por %p51, %p52
      %p54 = scmp.ne.s32.totalorder %s40, %s41
      %p55 = scmp.eq.s32.totalorder %s19, 1
      %p56 = por %p54, %p55
      %p58 = scmp.ne.s32.totalorder %s41, %s57
      %p59 = scmp.eq.s32.totalorder %s19, 0
      %p60 = por %p58, %p59
      %s61 = ssub.s32 %s21, %s28
      %s62 = ssub.s32 %s20, %s32
      %s63 = sor.u32 %s61, %s62
      %p64 = scmp.eq.s32.totalorder %s63, 0
      %s66 = sadd.s32 %s65, 1
      %s67 = scalar_select %p64, %s65, %s66
      %p70 = pneg %p64
      %p71 = scmp.eq.s32.totalorder %s13, 1
      %p72 = por %p70, %p71
      %p73 = scmp.ne.s32.totalorder %s65, %s68
      %p74 = scmp.eq.s32.totalorder %s13, 0
      %p75 = por %p73, %p74
      %p76 = scmp.ne.s32.totalorder %s65, %s68
      %p77 = scmp.eq.s32.totalorder %s18, 1
      %p78 = por %p76, %p77
      %p79 = scmp.ne.s32.totalorder %s68, %s69
      %p80 = scmp.eq.s32.totalorder %s18, 0
      %p81 = por %p79, %p80
      %p82 = scmp.ne.s32.totalorder %s68, %s69
      %p83 = scmp.eq.s32.totalorder %s19, 1
      %p84 = por %p82, %p83
      %p86 = scmp.ne.s32.totalorder %s69, %s85
      %p87 = scmp.eq.s32.totalorder %s19, 0
      %p88 = por %p86, %p87
      %s90 = sadd.s32 %s89, 1
      %p93 = scmp.eq.s32.totalorder %s13, 1
      %p94 = scmp.ne.s32.totalorder %s89, %s91
      %p95 = scmp.eq.s32.totalorder %s13, 0
      %p96 = por %p94, %p95
      %p97 = scmp.ne.s32.totalorder %s89, %s91
      %p98 = scmp.eq.s32.totalorder %s18, 1
      %p99 = por %p97, %p98
      %p100 = scmp.ne.s32.totalorder %s91, %s92
      %p101 = scmp.eq.s32.totalorder %s18, 0
      %p102 = por %p100, %p101
      %p103 = scmp.ne.s32.totalorder %s91, %s92
      %p104 = scmp.eq.s32.totalorder %s19, 1
      %p105 = por %p103, %p104
      %p107 = scmp.ne.s32.totalorder %s92, %s106
      %p108 = scmp.eq.s32.totalorder %s19, 0
      %p109 = por %p107, %p108
      %s111 = sadd.s32 %s110, 1
      %p114 = scmp.eq.s32.totalorder %s13, 1
      %p115 = scmp.ne.s32.totalorder %s110, %s112
      %p116 = scmp.eq.s32.totalorder %s13, 0
      %p117 = por %p115, %p116
      %p118 = scmp.ne.s32.totalorder %s110, %s112
      %p119 = scmp.eq.s32.totalorder %s18, 1
      %p120 = por %p118, %p119
      %p121 = scmp.ne.s32.totalorder %s112, %s113
      %p122 = scmp.eq.s32.totalorder %s18, 0
      %p123 = por %p121, %p122
      %p124 = scmp.ne.s32.totalorder %s112, %s113
      %p125 = scmp.eq.s32.totalorder %s19, 1
      %p126 = por %p124, %p125
      %p128 = scmp.ne.s32.totalorder %s113, %s127
      %p129 = scmp.eq.s32.totalorder %s19, 0
      %p130 = por %p128, %p129
      %s131 = ssub.s32 %s21, %s28
      %s132 = ssub.s32 %s20, %s32
      %s133 = sor.u32 %s131, %s132
      %p134 = scmp.eq.s32.totalorder %s133, 0
      %s136 = sadd.s32 %s135, 1
      %s137 = scalar_select %p134, %s135, %s136
      %p140 = pneg %p134
      %p141 = scmp.eq.s32.totalorder %s13, 1
      %p142 = por %p140, %p141
      %p143 = scmp.ne.s32.totalorder %s135, %s138
      %p144 = scmp.eq.s32.totalorder %s13, 0
      %p145 = por %p143, %p144
      %p146 = scmp.ne.s32.totalorder %s135, %s138
      %p147 = scmp.eq.s32.totalorder %s18, 1
      %p148 = por %p146, %p147
      %p149 = scmp.ne.s32.totalorder %s138, %s139
      %p150 = scmp.eq.s32.totalorder %s18, 0
      %p151 = por %p149, %p150
      %p152 = scmp.ne.s32.totalorder %s138, %s139
      %p153 = scmp.eq.s32.totalorder %s19, 1
      %p154 = por %p152, %p153
      %p156 = scmp.ne.s32.totalorder %s139, %s155
      %p157 = scmp.eq.s32.totalorder %s19, 0
      %p158 = por %p156, %p157
      %p159 = scmp.le.s32.totalorder 1, %s13
      %p160 = scmp.lt.s32.totalorder %s13, 3
      %p161 = pnand %p159, %p160
      %p162 = pneg %p161
      // Predicated region
      $region9: #{tpu_custom_call.1} parent=5 // pred_check
        _
      $region10: #{tpu_custom_call.1} parent=5 // pred_check_branch
        %164 = sbr.rel (%p161) target = $region12
      $region11: #{tpu_custom_call.1} parent=5 // pred_region
        %s165 = ssub.s32 %s13, 1
        // Predicated region
        $region13: #{tpu_custom_call.1} parent=11 // pred_check
          %p166 = pneg %p102
        $region14: #{tpu_custom_call.1} parent=11 // pred_check_branch
          %168 = sbr.rel (%p166) target = $region16
        $region15: #{tpu_custom_call.1} parent=11 // pred_region
          _
        $region16: #{tpu_custom_call.1} parent=11 // pred_fallthru
          _
        // Predicated region
        $region17: #{tpu_custom_call.1} parent=11 // pred_check
          %p169 = pneg %p123
        $region18: #{tpu_custom_call.1} parent=11 // pred_check_branch
          %171 = sbr.rel (%p169) target = $region20
        $region19: #{tpu_custom_call.1} parent=11 // pred_region
          _
        $region20: #{tpu_custom_call.1} parent=11 // pred_fallthru
          _
      $region12: #{tpu_custom_call.1} parent=5 // pred_fallthru
        _
      %p172 = scmp.lt.s32.totalorder %s13, 2
      // Predicated region
      $region21: #{tpu_custom_call.1} parent=5 // pred_check
        %p173 = pneg %p172
      $region22: #{tpu_custom_call.1} parent=5 // pred_check_branch
        %175 = sbr.rel (%p173) target = $region24
      $region23: #{tpu_custom_call.1} parent=5 // pred_region
        // Predicated region
        $region25: #{tpu_custom_call.1} parent=23 // pred_check
          %p176 = pneg %p47
        $region26: #{tpu_custom_call.1} parent=23 // pred_check_branch
          %178 = sbr.rel (%p176) target = $region28
        $region27: #{tpu_custom_call.1} parent=23 // pred_region
          %p179 = scmp.lt.s32.totalorder %s21, 1
          %s180 = scalar_select %p179, %s21, 1
          %p181 = scmp.lt.s32.totalorder %s20, 0
          %s182 = scalar_select %p181, %s20, 0
          %s183 = sadd.s32 %s182, %s180
          %s184 = smul.addr %s183, 4
          %s185 = scalar_lea.vmem %s0, %s184
        $region28: #{tpu_custom_call.1} parent=23 // pred_fallthru
          _
        // Predicated region
        $region29: #{tpu_custom_call.1} parent=23 // pred_check
          %p186 = pneg %p75
        $region30: #{tpu_custom_call.1} parent=23 // pred_check_branch
          %188 = sbr.rel (%p186) target = $region32
        $region31: #{tpu_custom_call.1} parent=23 // pred_region
          %p189 = scmp.lt.s32.totalorder %s21, 1
          %s190 = scalar_select %p189, %s21, 1
          %p191 = scmp.lt.s32.totalorder %s20, 0
          %s192 = scalar_select %p191, %s20, 0
          %s193 = sadd.s32 %s192, %s190
          %s194 = smul.addr %s193, 4
          %s195 = scalar_lea.vmem %s1, %s194
        $region32: #{tpu_custom_call.1} parent=23 // pred_fallthru
          _
      $region24: #{tpu_custom_call.1} parent=5 // pred_fallthru
        _
      %p196 = scmp.le.s32.totalorder 1, %s13
      %p197 = scmp.lt.s32.totalorder %s13, 3
      %p198 = pnand %p196, %p197
      %p199 = pneg %p198
      // Predicated region
      $region33: #{tpu_custom_call.1} parent=5 // pred_check
        _
      $region34: #{tpu_custom_call.1} parent=5 // pred_check_branch
        %201 = sbr.rel (%p198) target = $region36
      $region35: #{tpu_custom_call.1} parent=5 // pred_region
        %s202 = ssub.s32 %s13, 1
        %p203 = scmp.lt.s32.totalorder %s23, 1
        %s204 = scalar_select %p203, %s23, 1
        %p205 = scmp.lt.s32.totalorder %s22, 0
        %s206 = scalar_select %p205, %s22, 0
        %s207 = sadd.s32 %s206, %s204
        %s208 = smul.addr %s207, 4
        %s209 = scalar_lea.vmem %s0, %s208
        %p210 = pneg %p53
        %p211 = pneg %p50
        %p212 = scmp.lt.s32.totalorder %s23, 1
        %s213 = scalar_select %p212, %s23, 1
        %p214 = scmp.lt.s32.totalorder %s22, 0
        %s215 = scalar_select %p214, %s22, 0
        %s216 = sadd.s32 %s215, %s213
        %s217 = smul.addr %s216, 4
        %s218 = scalar_lea.vmem %s1, %s217
        %p219 = pneg %p81
        %p220 = pneg %p78
        %p221 = pneg %p102
        %p222 = pneg %p99
        %p223 = pneg %p123
        %p224 = pneg %p120
        %p225 = pneg %p151
        %p226 = pneg %p148
        %s227 = sand.u32 %s138, 1
        %s228 = scalar_lea.sflag [#allocation3], %s227
        %s229 = sand.u32 %s138, 1
        %s230 = smul.addr %s229, 4
        %s231 = scalar_lea.vmem [#allocation2], %s230
        %p232 = scmp.lt.s32.totalorder %s23, 1
        %s233 = scalar_select %p232, %s23, 1
        %p234 = scmp.lt.s32.totalorder %s22, 0
        %s235 = scalar_select %p234, %s22, 0
        %s236 = sadd.s32 %s235, %s233
        %s237 = smul.addr %s236, 4
        %s238 = scalar_lea.vmem %s0, %s237
        %p239 = scmp.lt.s32.totalorder %s23, 1
        %s240 = scalar_select %p239, %s23, 1
        %p241 = scmp.lt.s32.totalorder %s22, 0
        %s242 = scalar_select %p241, %s22, 0
        %s243 = sadd.s32 %s242, %s240
        %s244 = smul.addr %s243, 4
        %s245 = scalar_lea.vmem %s1, %s244
        %v246 = vld [vmem:[%s238] sm:$0xf]
        %v247 = vld [vmem:[%s245] sm:$0xf]
        %v248 = vld [vmem:[%s2] sm:$0xff]
        %v249 = vld [vmem:[%s2 + $0x8] sm:$0xff]
        %vm250 = vcmask 31744
        %v252 = vsel %vm250, %v248, 0
        %v255 = vsel %vm250, %v249, 0
        %vm257 = vcmask 1043456
        %v259 = vsel %vm257, %v247, 0
        %261 = vmatprep.subr.mxu0 0.0
        %262 = vmatpush1.msra.mxu0 %v259
        %263 = vmatprep.subr.mxu0 0.0
        %264 = vmatpush1.msra.mxu0 0.0
        %265 = vmatprep.subr.mxu0 0.0
        %266 = vmatpush1.msra.mxu0 0.0
        %267 = vmatprep.subr.mxu0 0.0
        %268 = vmatpush1.msra.mxu0 0.0
        %269 = vmatprep.subr.mxu0 0.0
        %270 = vmatpush1.msra.mxu0 0.0
        %271 = vmatprep.subr.mxu0 0.0
        %272 = vmatpush1.msra.mxu0 0.0
        %273 = vmatprep.subr.mxu0 0.0
        %274 = vmatpush1.msra.mxu0 0.0
        %275 = vmatprep.subr.mxu0 0.0
        %276 = vmatpush1.msra.mxu0 0.0
        %277 = vmatprep.subr.mxu0 0.0
        %278 = vmatpush1.msra.mxu0 0.0
        %279 = vmatprep.subr.mxu0 0.0
        %280 = vmatpush1.msra.mxu0 0.0
        %281 = vmatprep.subr.mxu0 0.0
        %282 = vmatpush1.msra.mxu0 0.0
        %283 = vmatprep.subr.mxu0 0.0
        %284 = vmatpush1.msra.mxu0 0.0
        %285 = vmatprep.subr.mxu0 0.0
        %286 = vmatpush1.msra.mxu0 0.0
        %287 = vmatprep.subr.mxu0 0.0
        %288 = vmatpush1.msra.mxu0 0.0
        %289 = vmatprep.subr.mxu0 0.0
        %290 = vmatpush1.msra.mxu0 0.0
        %291 = vmatprep.subr.mxu0 0.0
        %292 = vmatpush1.msra.mxu0 0.0
        %293 = vmatprep.subr.mxu0 0.0
        %294 = vmatpush1.msra.mxu0 0.0
        %295 = vmatprep.subr.mxu0 0.0
        %296 = vmatpush1.msra.mxu0 0.0
        %297 = vmatprep.subr.mxu0 0.0
        %298 = vmatpush1.msra.mxu0 0.0
        %299 = vmatprep.subr.mxu0 0.0
        %300 = vmatpush1.msra.mxu0 0.0
        %301 = vmatprep.subr.mxu0 0.0
        %302 = vmatpush1.msra.mxu0 0.0
        %303 = vmatprep.subr.mxu0 0.0
        %304 = vmatpush1.msra.mxu0 0.0
        %305 = vmatprep.subr.mxu0 0.0
        %306 = vmatpush1.msra.mxu0 0.0
        %307 = vmatprep.subr.mxu0 0.0
        %308 = vmatpush1.msra.mxu0 0.0
        %309 = vmatprep.subr.mxu0 0.0
        %310 = vmatpush1.msra.mxu0 0.0
        %311 = vmatprep.subr.mxu0 0.0
        %312 = vmatpush1.msra.mxu0 0.0
        %313 = vmatprep.subr.mxu0 0.0
        %314 = vmatpush1.msra.mxu0 0.0
        %315 = vmatprep.subr.mxu0 0.0
        %316 = vmatpush1.msra.mxu0 0.0
        %317 = vmatprep.subr.mxu0 0.0
        %318 = vmatpush1.msra.mxu0 0.0
        %319 = vmatprep.subr.mxu0 0.0
        %320 = vmatpush1.msra.mxu0 0.0
        %321 = vmatprep.subr.mxu0 0.0
        %322 = vmatpush1.msra.mxu0 0.0
        %323 = vmatprep.subr.mxu0 0.0
        %324 = vmatpush1.msra.mxu0 0.0
        %325 = vmatprep.mubr.f32.mxu0 0.0
        %326 = vmatmul.mubr.f32.gmra.mrb[0].mxu0 %v252
        %v327 = vpop.f32.mrb[0].mxu0
        %v328 = vadd.f32 0.0, %v327
        %v329 = vpop.f32.mrb[0].mxu0
        %330 = vmatprep.mubr.f32.mxu0 0.0
        %331 = vmatmul.mubr.f32.gmra.mrb[0].mxu0 %v255
        %v332 = vpop.f32.mrb[0].mxu0
        %v333 = vadd.f32 0.0, %v332
        %v334 = vpop.f32.mrb[0].mxu0
        %335 = vdwg.mxu0
        %v336 = vld [vmem:[%s3] sm:$0xf]
        %v338 = vsel %vm250, %v336, 0
        %v341 = vsel %vm257, %v246, 0
        %343 = vmatprep.subr.mxu0 0.0
        %344 = vmatpush1.msra.mxu0 %v341
        %345 = vmatprep.subr.mxu0 0.0
        %346 = vmatpush1.msra.mxu0 0.0
        %347 = vmatprep.subr.mxu0 0.0
        %348 = vmatpush1.msra.mxu0 0.0
        %349 = vmatprep.subr.mxu0 0.0
        %350 = vmatpush1.msra.mxu0 0.0
        %351 = vmatprep.subr.mxu0 0.0
        %352 = vmatpush1.msra.mxu0 0.0
        %353 = vmatprep.subr.mxu0 0.0
        %354 = vmatpush1.msra.mxu0 0.0
        %355 = vmatprep.subr.mxu0 0.0
        %356 = vmatpush1.msra.mxu0 0.0
        %357 = vmatprep.subr.mxu0 0.0
        %358 = vmatpush1.msra.mxu0 0.0
        %359 = vmatprep.subr.mxu0 0.0
        %360 = vmatpush1.msra.mxu0 0.0
        %361 = vmatprep.subr.mxu0 0.0
        %362 = vmatpush1.msra.mxu0 0.0
        %363 = vmatprep.subr.mxu0 0.0
        %364 = vmatpush1.msra.mxu0 0.0
        %365 = vmatprep.subr.mxu0 0.0
        %366 = vmatpush1.msra.mxu0 0.0
        %367 = vmatprep.subr.mxu0 0.0
        %368 = vmatpush1.msra.mxu0 0.0
        %369 = vmatprep.subr.mxu0 0.0
        %370 = vmatpush1.msra.mxu0 0.0
        %371 = vmatprep.subr.mxu0 0.0
        %372 = vmatpush1.msra.mxu0 0.0
        %373 = vmatprep.subr.mxu0 0.0
        %374 = vmatpush1.msra.mxu0 0.0
        %375 = vmatprep.subr.mxu0 0.0
        %376 = vmatpush1.msra.mxu0 0.0
        %377 = vmatprep.subr.mxu0 0.0
        %378 = vmatpush1.msra.mxu0 0.0
        %379 = vmatprep.subr.mxu0 0.0
        %380 = vmatpush1.msra.mxu0 0.0
        %381 = vmatprep.subr.mxu0 0.0
        %382 = vmatpush1.msra.mxu0 0.0
        %383 = vmatprep.subr.mxu0 0.0
        %384 = vmatpush1.msra.mxu0 0.0
        %385 = vmatprep.subr.mxu0 0.0
        %386 = vmatpush1.msra.mxu0 0.0
        %387 = vmatprep.subr.mxu0 0.0
        %388 = vmatpush1.msra.mxu0 0.0
        %389 = vmatprep.subr.mxu0 0.0
        %390 = vmatpush1.msra.mxu0 0.0
        %391 = vmatprep.subr.mxu0 0.0
        %392 = vmatpush1.msra.mxu0 0.0
        %393 = vmatprep.subr.mxu0 0.0
        %394 = vmatpush1.msra.mxu0 0.0
        %395 = vmatprep.subr.mxu0 0.0
        %396 = vmatpush1.msra.mxu0 0.0
        %397 = vmatprep.subr.mxu0 0.0
        %398 = vmatpush1.msra.mxu0 0.0
        %399 = vmatprep.subr.mxu0 0.0
        %400 = vmatpush1.msra.mxu0 0.0
        %401 = vmatprep.subr.mxu0 0.0
        %402 = vmatpush1.msra.mxu0 0.0
        %403 = vmatprep.subr.mxu0 0.0
        %404 = vmatpush1.msra.mxu0 0.0
        %405 = vmatprep.subr.mxu0 0.0
        %406 = vmatpush1.msra.mxu0 0.0
        %407 = vmatprep.mubr.f32.mxu0 0.0
        %408 = vmatmul.mubr.f32.gmra.mrb[0].mxu0 %v338
        %v409 = vpop.f32.mrb[0].mxu0
        %v410 = vadd.f32 0.0, %v409
        %v411 = vpop.f32.mrb[0].mxu0
        %412 = vdwg.mxu0
        %v413 = vlaneseq
        %v414 = vshrl.u32 %v413, 7
        %v415 = vsub.s32 0, %v414
        %v416 = vrot.slane %v333, %v415
        %v417 = vmul.f32 %v328, %v416
        %v418 = vsel %vm257, %v417, 0.0
        %v419 = vrot.slane %v418, 4
        %v420 = vadd.f32 %v418, %v419
        %v421 = vrot.slane %v420, 2
        %v422 = vadd.f32 %v420, %v421
        %v423 = vrot.slane %v422, 1
        %v424 = vadd.f32 %v422, %v423
        %v425 = vadd.f32 %v424, 1e-09
        %v426 = vrcp.pop %v425
        %v427 = vmul.f32 %v417, %v426
        %v428 = vsel %vm257, %v427, -inf
        %v429 = vrot.slane %v428, 4
        %v430 = vmax.f32 %v428, %v429
        %v431 = vrot.slane %v430, 2
        %v432 = vmax.f32 %v430, %v431
        %v433 = vrot.slane %v432, 1
        %v434 = vmax.f32 %v432, %v433
        %v435 = vsub.f32 %v427, %v434
        %v436 = vmul.f32 %v435, 1.442695
        %v437 = vpow.pop %v436
        %v438 = vsel %vm257, %v437, 0.0
        %v439 = vrot.slane %v438, 4
        %v440 = vadd.f32 %v438, %v439
        %v441 = vrot.slane %v440, 2
        %v442 = vadd.f32 %v440, %v441
        %v443 = vrot.slane %v442, 1
        %v444 = vadd.f32 %v442, %v443
        %v445 = vrcp.pop %v444
        %v446 = vmul.f32 %v437, %v445
        %v447 = vmul.f32 %v446, %v410
        %v448 = vadd.f32 %v447, %v246
        %449 = vst [vmem:[%s231] sm:$0xf] %v448
        %s450 = sand.u32 %s138, 1
        %s451 = scalar_lea.sflag [#allocation3], %s450
        %s452 = sand.u32 %s138, 1
        %s453 = smul.addr %s452, 4
        %s454 = scalar_lea.vmem [#allocation2], %s453
        // Predicated region
        $region37: #{tpu_custom_call.1} parent=35 // pred_check
          %p455 = pneg %p148
        $region38: #{tpu_custom_call.1} parent=35 // pred_check_branch
          %457 = sbr.rel (%p455) target = $region40
        $region39: #{tpu_custom_call.1} parent=35 // pred_region
          %s459 = ssub.s32 64, 64
          %460 = vsyncadd %s451, %s459
          %s461 = sadd.s32 %s22, %s23
          %s462 = smul.addr %s461, 64
          %s463 = scalar_lea.hbm %s4, %s462
          %s465 = sshll.u32 %s454, 4
          %s466 = int_to_ptr.vmem [resolvable:$true] %s465
          %468 = dma.vmem_to_hbm [thread:$0]  %s466, 64, %s463, %s451
        $region40: #{tpu_custom_call.1} parent=35 // pred_fallthru
          _
      $region36: #{tpu_custom_call.1} parent=5 // pred_fallthru
        _
      %p469 = scmp.le.s32.totalorder 2, %s13
      // Predicated region
      $region41: #{tpu_custom_call.1} parent=5 // pred_check
        %p470 = pneg %p469
      $region42: #{tpu_custom_call.1} parent=5 // pred_check_branch
        %472 = sbr.rel (%p470) target = $region44
      $region43: #{tpu_custom_call.1} parent=5 // pred_region
        %s473 = ssub.s32 %s13, 2
        // Predicated region
        $region45: #{tpu_custom_call.1} parent=43 // pred_check
          %p474 = pneg %p154
        $region46: #{tpu_custom_call.1} parent=43 // pred_check_branch
          %476 = sbr.rel (%p474) target = $region48
        $region47: #{tpu_custom_call.1} parent=43 // pred_region
          %s477 = sand.u32 %s139, 1
          %s478 = scalar_lea.sflag [#allocation3], %s477
          %s479 = sand.u32 %s139, 1
          %s480 = smul.addr %s479, 4
          %s481 = scalar_lea.vmem [#allocation2], %s480
          %482 = dma.done %s478, 64
        $region48: #{tpu_custom_call.1} parent=43 // pred_fallthru
          _
      $region44: #{tpu_custom_call.1} parent=5 // pred_fallthru
        _
    $region6: #{tpu_custom_call.1} parent=1 // loop_footer
      %s17 = sadd.s32 1, %s13
    $region7: #{tpu_custom_call.1} parent=1 // loop_footer_branch
      %12 = sbr.rel target = $region3
    $region8: #{tpu_custom_call.1} parent=1 // loop_exit
      _
    %483 = vsyncpa [#allocation3], 1
    %s484 = scalar_lea.sflag [#allocation3], 1
    %485 = vsyncpa %s484, 1

</llo_original>
